<compile_context>
chip_gen: v7x
topology: tpu7x:2x2x1
jax: 0.10.0
libtpu: 0.0.40
codegen_flags: <defaults>
</compile_context>

<pallas_src>
import functools
import math

import jax
import jax.numpy as jnp
from jax import lax
from jax.experimental import pallas as pl
from jax.experimental.pallas import tpu as pltpu

# SELU constants (identical to torch.nn.SELU)
_SELU_ALPHA = 1.6732632423543772848170429916717
_SELU_SCALE = 1.0507009873554804934193349852946


def _round_up(x: int, m: int) -> int:
    return ((x + m - 1) // m) * m


def _sigmoid(x):
    return 1.0 / (1.0 + jnp.exp(-x))


def _expm1_stable(y):
    # expm1 accurate near 0 without relying on a lax.expm1 Mosaic lowering (y <= 0 here).
    small = jnp.abs(y) < 1e-4
    return jnp.where(small, y * (1.0 + 0.5 * y), jnp.exp(y) - 1.0)


# ----------------------------------------------------------------------------
# Embedding lookup: scalar-prefetch row gather (ids in SMEM drive the index_map)
# ----------------------------------------------------------------------------
def _gather_kernel(ids_ref, emb_ref, o_ref):
    del ids_ref  # only used by the index_maps
    o_ref[...] = emb_ref[...]


def embedding_lookup(ids, emb_table):
    """ids: (M,) int32, emb_table: (V, E) -> (M, E)."""
    M = ids.shape[0]
    V, E = emb_table.shape
    emb3 = emb_table.reshape(V, 1, E)        # gathered axis becomes a leading (un-tiled) dim
    out = pl.pallas_call(
        _gather_kernel,
        out_shape=jax.ShapeDtypeStruct((M, 1, E), emb_table.dtype),
        grid_spec=pltpu.PrefetchScalarGridSpec(
            num_scalar_prefetch=1,
            grid=(M,),
            in_specs=[pl.BlockSpec((1, 1, E), lambda i, ids_ref: (ids_ref[i], 0, 0))],
            out_specs=pl.BlockSpec((1, 1, E), lambda i, ids_ref: (i, 0, 0)),
        ),
        compiler_params=pltpu.CompilerParams(dimension_semantics=("arbitrary",)),
    )(ids.astype(jnp.int32), emb3)
    return out.reshape(M, E)


# ----------------------------------------------------------------------------
# Multi-layer LSTM: one kernel invocation, lax.fori_loop over time, fused ih/hh matmul
# ----------------------------------------------------------------------------
def _make_lstm_kernel(num_layers, seq_len, hidden_p):
    def kernel(*refs):
        x_ref = refs[0]                               # (T, Bp, Dp) bf16
        w_refs = refs[1:1 + 2 * num_layers]           # per layer: W_cat (Kl, 4Hp) bf16, b (1, 4Hp) f32
        o_ref = refs[1 + 2 * num_layers]              # (T, Bp, Hp) bf16
        h_ref = refs[2 + 2 * num_layers]              # (L, Bp, Hp) f32 scratch
        c_ref = refs[3 + 2 * num_layers]              # (L, Bp, Hp) f32 scratch

        h_ref[...] = jnp.zeros_like(h_ref)
        c_ref[...] = jnp.zeros_like(c_ref)

        def step(t, carry):
            x = x_ref[t]                              # (Bp, Dp) bf16
            for l in range(num_layers):
                W = w_refs[2 * l][...]
                b = w_refs[2 * l + 1][...]
                # Fused input/hidden matmul: dot(concat([x, h]), [wih; whh]) on a lane-aligned boundary.
                xin = jnp.concatenate([x, h_ref[l].astype(jnp.bfloat16)], axis=-1)
                gates = jnp.dot(xin, W, preferred_element_type=jnp.float32) + b
                i_g = _sigmoid(gates[:, 0 * hidden_p:1 * hidden_p])
                f_g = _sigmoid(gates[:, 1 * hidden_p:2 * hidden_p])
                g_g = jnp.tanh(gates[:, 2 * hidden_p:3 * hidden_p])
                o_g = _sigmoid(gates[:, 3 * hidden_p:4 * hidden_p])
                c_new = f_g * c_ref[l] + i_g * g_g
                h_new = o_g * jnp.tanh(c_new)
                h_ref[l] = h_new
                c_ref[l] = c_new
                x = h_new.astype(jnp.bfloat16)
            o_ref[t] = x
            return carry

        lax.fori_loop(0, seq_len, step, 0)

    return kernel


def lstm_forward(x_tm, lstm_params, hidden_p):
    """x_tm: (T, Bp, Dp) bf16 time-major; lstm_params: [(W_cat bf16, bias (1,4Hp) f32), ...]."""
    T, Bp, Dp = x_tm.shape
    L = len(lstm_params)

    weight_args = []
    in_specs = [pl.BlockSpec((T, Bp, Dp), lambda i: (0, 0, 0))]
    for (W, b) in lstm_params:
        weight_args += [W, b]
        in_specs.append(pl.BlockSpec(W.shape, lambda i: (0, 0)))
        in_specs.append(pl.BlockSpec(b.shape, lambda i: (0, 0)))

    out = pl.pallas_call(
        _make_lstm_kernel(L, T, hidden_p),
        out_shape=jax.ShapeDtypeStruct((T, Bp, hidden_p), jnp.bfloat16),
        grid_spec=pltpu.PrefetchScalarGridSpec(
            num_scalar_prefetch=0,
            grid=(1,),                                 # whole time loop inside one invocation
            in_specs=in_specs,
            out_specs=pl.BlockSpec((T, Bp, hidden_p), lambda i: (0, 0, 0)),
            scratch_shapes=[pltpu.VMEM((L, Bp, hidden_p), jnp.float32),
                            pltpu.VMEM((L, Bp, hidden_p), jnp.float32)],
        ),
        compiler_params=pltpu.CompilerParams(
            dimension_semantics=("arbitrary",),
            vmem_limit_bytes=32 * 1024 * 1024),
    )(x_tm, *weight_args)
    return out


# ----------------------------------------------------------------------------
# fc1: tiled Linear + SELU with the masked softmax fused into the finalize epilogue
# ----------------------------------------------------------------------------
def _linear_selu_softmax_kernel(x_ref, w_ref, b_ref, logits_ref, probs_ref, acc_ref, *, n_valid):
    k = pl.program_id(1)

    @pl.when(k == 0)
    def _init():
        acc_ref[...] = jnp.zeros_like(acc_ref)

    acc_ref[...] += jnp.dot(x_ref[...], w_ref[...], preferred_element_type=jnp.float32)

    @pl.when(k == pl.num_programs(1) - 1)
    def _finalize():
        y = acc_ref[...] + b_ref[...]                              # (tm, Np) + (1, Np)
        neg = _SELU_ALPHA * _expm1_stable(jnp.minimum(y, 0.0))
        logits = _SELU_SCALE * jnp.where(y > 0.0, y, neg)
        logits_ref[...] = logits.astype(logits_ref.dtype)
        # Masked softmax over the valid vocab columns (padding masked out).
        col = lax.broadcasted_iota(jnp.int32, logits.shape, 1)
        valid = col < n_valid
        z = jnp.where(valid, logits, -1e30)
        m = jnp.max(z, axis=-1, keepdims=True)
        e = jnp.where(valid, jnp.exp(z - m), 0.0)
        s = jnp.sum(e, axis=-1, keepdims=True)
        probs_ref[...] = (e * pl.reciprocal(s, approx=True)).astype(probs_ref.dtype)


def linear_selu_softmax(x, w_p, b_p, *, n_valid, tm=256, tk=512):
    """(logits, probs) = (SELU(x @ w_p + b_p), softmax over first n_valid cols).

    x: (M, Kp), w_p: (Kp, Np) pre-padded bf16 weight, b_p: (1, Np) pre-padded f32 bias.
    Kp/Np are multiples of 128 (done once at parameter init). Returns padded (Mp, Np) arrays.
    """
    M, Kp = x.shape
    Kw, Np = w_p.shape
    assert Kp == Kw and Kp % 128 == 0 and Np % 128 == 0

    tm = max(8, min(_round_up(M, 8), _round_up(tm, 8)))
    tk = max(128, min(_round_up(tk, 128), Kp))
    while Kp % tk:
        tk -= 128
    Mp = _round_up(M, tm)

    xp = jnp.pad(x.astype(jnp.bfloat16), ((0, Mp - M), (0, 0)))
    grid = (Mp // tm, Kp // tk)

    cost = pl.CostEstimate(
        flops=2 * M * Kp * Np,
        transcendentals=2 * M * Np,                                # SELU exp + softmax exp
        bytes_accessed=M * Kp * 2 + Kp * Np * 2 + Np * 4 + 2 * M * Np * 4,
    )

    logits, probs = pl.pallas_call(
        functools.partial(_linear_selu_softmax_kernel, n_valid=n_valid),
        out_shape=(jax.ShapeDtypeStruct((Mp, Np), jnp.float32),
                   jax.ShapeDtypeStruct((Mp, Np), jnp.float32)),
        grid_spec=pltpu.PrefetchScalarGridSpec(
            num_scalar_prefetch=0,
            grid=grid,
            in_specs=[
                pl.BlockSpec((tm, tk), lambda i, k: (i, k)),
                pl.BlockSpec((tk, Np), lambda i, k: (k, 0)),
                pl.BlockSpec((1, Np), lambda i, k: (0, 0)),
            ],
            out_specs=[pl.BlockSpec((tm, Np), lambda i, k: (i, 0)),
                       pl.BlockSpec((tm, Np), lambda i, k: (i, 0))],
            scratch_shapes=[pltpu.VMEM((tm, Np), jnp.float32)],
        ),
        compiler_params=pltpu.CompilerParams(
            dimension_semantics=("parallel", "arbitrary"),
            vmem_limit_bytes=32 * 1024 * 1024),
        cost_estimate=cost,
    )(xp, w_p, b_p)
    return logits, probs


# ----------------------------------------------------------------------------
# Parameter init (packs kernel-ready padded bf16 weights ONCE, per review)
# ----------------------------------------------------------------------------
def _pack_lstm_layer(w_ih, w_hh, b_ih, b_hh, d_in, d_in_p, H, Hp):
    """Pack torch-layout (4H, d_in)/(4H, H) weights into one lane-aligned [wih; whh] slab."""
    W = jnp.zeros((d_in_p + Hp, 4 * Hp), jnp.float32)
    b = jnp.zeros((1, 4 * Hp), jnp.float32)
    for g in range(4):                                             # gate order i, f, g, o (torch)
        W = W.at[:d_in, g * Hp:g * Hp + H].set(w_ih[g * H:(g + 1) * H, :].T)
        W = W.at[d_in_p:d_in_p + H, g * Hp:g * Hp + H].set(w_hh[g * H:(g + 1) * H, :].T)
        b = b.at[0, g * Hp:g * Hp + H].set(b_ih[g * H:(g + 1) * H] + b_hh[g * H:(g + 1) * H])
    return W.astype(jnp.bfloat16), b


def init_decoder_params(key, vocab_size, word_embed_dim, latent_size,
                        hidden_size, num_layers, pad_idx):
    H = hidden_size
    Hp = _round_up(H, 128)
    D = latent_size + word_embed_dim
    Dp = _round_up(D, 128)
    Np = _round_up(vocab_size, 128)

    keys = jax.random.split(key, 3 + 4 * num_layers)
    emb = jax.random.uniform(keys[0], (vocab_size, word_embed_dim),
                             minval=-0.1, maxval=0.1, dtype=jnp.float32)
    emb = emb.at[pad_idx].set(0.0)                                 # nn.Embedding padding_idx row

    lstm = []
    kH = 1.0 / math.sqrt(H)
    idx = 1
    for l in range(num_layers):
        d_in = D if l == 0 else H
        d_in_p = Dp if l == 0 else Hp
        w_ih = jax.random.uniform(keys[idx], (4 * H, d_in), minval=-kH, maxval=kH,
                                  dtype=jnp.float32); idx += 1
        w_hh = jax.random.uniform(keys[idx], (4 * H, H), minval=-kH, maxval=kH,
                                  dtype=jnp.float32); idx += 1
        b_ih = jax.random.uniform(keys[idx], (4 * H,), minval=-kH, maxval=kH,
                                  dtype=jnp.float32); idx += 1
        b_hh = jax.random.uniform(keys[idx], (4 * H,), minval=-kH, maxval=kH,
                                  dtype=jnp.float32); idx += 1
        lstm.append(_pack_lstm_layer(w_ih, w_hh, b_ih, b_hh, d_in, d_in_p, H, Hp))

    std = math.sqrt(2.0 / (H + vocab_size))                        # xavier_normal_
    fc_w = std * jax.random.normal(keys[idx], (vocab_size, H), dtype=jnp.float32); idx += 1
    bound = 1.0 / math.sqrt(H)
    fc_b = jax.random.uniform(keys[idx], (vocab_size,), minval=-bound, maxval=bound,
                              dtype=jnp.float32)
    # Pre-pad / pre-cast fc1 weight+bias once (review item: no per-call pad+cast of the weight).
    fc_w_p = (jnp.zeros((Hp, Np), jnp.float32).at[:H, :vocab_size].set(fc_w.T)
              .astype(jnp.bfloat16))
    fc_b_p = jnp.zeros((1, Np), jnp.float32).at[0, :vocab_size].set(fc_b)

    return dict(emb=emb, lstm=lstm, fc_w_p=fc_w_p, fc_b_p=fc_b_p,
                vocab_size=vocab_size, word_embed_dim=word_embed_dim,
                latent_size=latent_size, num_layers=num_layers,
                H=H, Hp=Hp, D=D, Dp=Dp, Np=Np)


# ----------------------------------------------------------------------------
# Decoder (teacher-forcing) forward
# ----------------------------------------------------------------------------
def decoder_forward(params, X_ids, Z):
    """Teacher-forcing path of Decoder.forward: returns (logits, softmax(logits))."""
    B, T = X_ids.shape
    V = params["vocab_size"]; E = params["word_embed_dim"]; Lz = params["latent_size"]
    Hp = params["Hp"]; D = params["D"]; Dp = params["Dp"]

    emb = embedding_lookup(X_ids.reshape(-1), params["emb"]).reshape(B, T, E)
    z_rep = jnp.broadcast_to(Z[:, None, :], (B, T, Lz))
    lstm_in = jnp.concatenate([z_rep, emb], axis=-1)               # (B, T, D)

    Bp = max(8, _round_up(B, 8))                                   # >= 8 sublanes
    x_tm = jnp.transpose(lstm_in, (1, 0, 2))                       # (T, B, D)
    x_tm = jnp.pad(x_tm, ((0, 0), (0, Bp - B), (0, Dp - D))).astype(jnp.bfloat16)

    h_seq = lstm_forward(x_tm, params["lstm"], Hp)                 # (T, Bp, Hp) bf16
    h_flat = jnp.transpose(h_seq, (1, 0, 2))[:B].reshape(B * T, Hp)

    logits_p, probs_p = linear_selu_softmax(h_flat, params["fc_w_p"], params["fc_b_p"],
                                            n_valid=V)
    logits = logits_p[:B * T, :V].reshape(B, T, V)
    probs = probs_p[:B * T, :V].reshape(B, T, V)
    # TODO(synk): free-running (X is None) greedy/argmax decode loop not implemented.
    return logits, probs


# ----------------------------------------------------------------------------
# Pure-JAX reference (same packed bf16 weights / same padded math as the kernels)
# ----------------------------------------------------------------------------
def _selu_ref(y):
    return _SELU_SCALE * jnp.where(y > 0.0, y, _SELU_ALPHA * jnp.expm1(jnp.minimum(y, 0.0)))


def decoder_forward_ref(params, X_ids, Z):
    B, T = X_ids.shape
    V = params["vocab_size"]; E = params["word_embed_dim"]; Lz = params["latent_size"]
    Hp = params["Hp"]; D = params["D"]; Dp = params["Dp"]; L = params["num_layers"]

    emb = params["emb"][X_ids]                                     # (B, T, E)
    z_rep = jnp.broadcast_to(Z[:, None, :], (B, T, Lz))
    x = jnp.concatenate([z_rep, emb], axis=-1)
    x = jnp.pad(x, ((0, 0), (0, 0), (0, Dp - D))).astype(jnp.bfloat16)

    h = [jnp.zeros((B, Hp), jnp.float32) for _ in range(L)]
    c = [jnp.zeros((B, Hp), jnp.float32) for _ in range(L)]
    outs = []
    for t in range(T):
        inp = x[:, t]
        for l in range(L):
            W, b = params["lstm"][l]
            xin = jnp.concatenate([inp, h[l].astype(jnp.bfloat16)], axis=-1)
            g = jnp.dot(xin, W, preferred_element_type=jnp.float32) + b
            i_g = _sigmoid(g[:, 0 * Hp:1 * Hp])
            f_g = _sigmoid(g[:, 1 * Hp:2 * Hp])
            g_g = jnp.tanh(g[:, 2 * Hp:3 * Hp])
            o_g = _sigmoid(g[:, 3 * Hp:4 * Hp])
            c[l] = f_g * c[l] + i_g * g_g
            h[l] = o_g * jnp.tanh(c[l])
            inp = h[l].astype(jnp.bfloat16)
        outs.append(inp)
    hseq = jnp.stack(outs, axis=1).reshape(B * T, Hp)

    y = jnp.dot(hseq, params["fc_w_p"], preferred_element_type=jnp.float32) + params["fc_b_p"]
    logits = _selu_ref(y)[:, :V].reshape(B, T, V)
    probs = jax.nn.softmax(logits, axis=-1)
    return logits, probs


if __name__ == "__main__":
    key = jax.random.PRNGKey(0)
    k_ids, k_z, k_p, k_x2, k_w2, k_b2 = jax.random.split(key, 6)

    # Small shapes consistent with the Decoder module.
    batch, seq_len = 2, 8
    vocab_size, word_embed_dim, latent_size = 32, 16, 16
    hidden_size, num_layers, pad_idx = 32, 2, 0

    params = init_decoder_params(k_p, vocab_size, word_embed_dim, latent_size,
                                 hidden_size, num_layers, pad_idx)
    X_ids = jax.random.randint(k_ids, (batch, seq_len), 0, vocab_size, dtype=jnp.int32)
    Z = jax.random.normal(k_z, (batch, latent_size), dtype=jnp.float32)

    logits, probs = decoder_forward(params, X_ids, Z)
    jax.block_until_ready((logits, probs))

    logits_ref, probs_ref = decoder_forward_ref(params, X_ids, Z)
    assert logits.shape == (batch, seq_len, vocab_size)
    assert probs.shape == (batch, seq_len, vocab_size)
    assert bool(jnp.allclose(jnp.sum(probs, axis=-1), 1.0, atol=1e-2))
    assert bool(jnp.allclose(logits, logits_ref, atol=1e-2, rtol=1e-2))
    assert bool(jnp.allclose(probs, probs_ref, atol=1e-2, rtol=1e-2))

    # Secondary check: exercise the tiled fc1(+softmax) path with multi-tile M, multi-step K,
    # and masked (padded) vocab columns.
    M2, K2p, N2p, V2 = 384, 1024, 256, 200
    x2 = jax.random.normal(k_x2, (M2, K2p), dtype=jnp.float32)
    w2 = 0.05 * jax.random.normal(k_w2, (K2p, N2p), dtype=jnp.float32)
    w2_bf = w2.astype(jnp.bfloat16)
    b2 = jnp.zeros((1, N2p), jnp.float32).at[0, :V2].set(
        0.1 * jax.random.normal(k_b2, (V2,), dtype=jnp.float32))
    lg2, pr2 = linear_selu_softmax(x2, w2_bf, b2, n_valid=V2)
    jax.block_until_ready((lg2, pr2))
    y2 = jnp.dot(x2.astype(jnp.bfloat16), w2_bf, preferred_element_type=jnp.float32) + b2
    lg2_ref = _selu_ref(y2)
    pr2_ref = jax.nn.softmax(lg2_ref[:, :V2], axis=-1)
    assert bool(jnp.allclose(lg2[:M2, :V2], lg2_ref[:, :V2], atol=1e-2, rtol=1e-2))
    assert bool(jnp.allclose(pr2[:M2, :V2], pr2_ref, atol=1e-2, rtol=1e-2))

    print("KERNEL_OK")
</pallas_src>

<mosaic_0001>
module attributes {stable_mosaic.version = 11 : i64} {
  func.func @_gather_kernel(%arg0: i32, %arg1: memref<16xi32, #tpu.memory_space<smem>>, %arg2: memref<1x1x16xf32, #tpu.memory_space<vmem>>, %arg3: memref<1x1x16xf32, #tpu.memory_space<vmem>>) attributes {dimension_semantics = [#tpu.dimension_semantics<arbitrary>], iteration_bounds = array<i64: 16>, scalar_prefetch = 1 : i64, scratch_operands = 0 : i64, tpu.core_type = #tpu.core_type<tc>, window_params = [{transform_indices = @transform_0, window_bounds = array<i64: 1, 1, 16>}, {transform_indices = @transform_1, window_bounds = array<i64: 1, 1, 16>}]} {
    %c0 = arith.constant 0 : index
    %c0_0 = arith.constant 0 : index
    %c0_1 = arith.constant 0 : index
    %0 = vector.load %arg2[%c0, %c0_0, %c0_1] : memref<1x1x16xf32, #tpu.memory_space<vmem>>, vector<1x1x16xf32>
    %c0_2 = arith.constant 0 : index
    %c0_3 = arith.constant 0 : index
    %c0_4 = arith.constant 0 : index
    %1 = vector.load %arg3[%c0_2, %c0_3, %c0_4] : memref<1x1x16xf32, #tpu.memory_space<vmem>>, vector<1x1x16xf32>
    tpu.vector_store %arg3[%c0_2, %c0_3, %c0_4], %0 {strides = array<i32>} : memref<1x1x16xf32, #tpu.memory_space<vmem>>, vector<1x1x16xf32>,
    return
  }
  func.func @transform_0(%arg0: i32, %arg1: memref<16xi32, #tpu.memory_space<smem>>) -> (i32, i32, i32) {
    %0 = arith.index_cast %arg0 : i32 to index
    %1 = memref.load %arg1[%0] : memref<16xi32, #tpu.memory_space<smem>>
    %c0_i32 = arith.constant 0 : i32
    %c0_i32_0 = arith.constant 0 : i32
    %c0_i32_1 = arith.constant 0 : i32
    return %1, %c0_i32, %c0_i32_0 : i32, i32, i32
  }
  func.func @transform_1(%arg0: i32, %arg1: memref<16xi32, #tpu.memory_space<smem>>) -> (i32, i32, i32) {
    %c0_i32 = arith.constant 0 : i32
    %c0_i32_0 = arith.constant 0 : i32
    %c0_i32_1 = arith.constant 0 : i32
    return %arg0, %c0_i32, %c0_i32_0 : i32, i32, i32
  }
}

</mosaic_0001>

<llo_original>
// kernel: tpu_custom_call.1
$region0: #{tpu_custom_call.1}
  #allocation0 [shape = 'u32[]', space=smem, size = 0x4, offset = 0x4, fixed_abs, tag = 'smem constant byte address 0x4 - core index']
  #allocation1 [shape = 'u32[144,128]{1,0:T(1,128)}', space=vmem, size = 0x12000, scoped, tag = 'internal scratch']
  #allocation2 [shape = 's32[1]{0}', space=sflag, size = 0x4, scoped, tag = 'scoped memory for tpu_custom_call.1']
  #allocation3 [shape = 'u8[512]{0}', space=smem, size = 0x200, scoped, tag = 'prefetched SMEM operand 0']
  %s0 = inlined_call_operand.vmem [shape: s32[16], index: 0, kind: input, shape index: {}]
  %s1 = inlined_call_operand.vmem [shape: f32[32,1,16], index: 1, kind: input, shape index: {}]
  %s2 = inlined_call_operand.hbm [shape: f32[16,1,16], index: 2, kind: output, shape index: {}]
  %s3 = sld [smem:[#allocation0]]
  $region37: #{tpu_custom_call.1} parent=0
    _
  %s5 = ssub.s32 1, %s3
  %s6 = scalar_select 0, %s5, %s3
  %s7 = sshll.u32 %s0, 4
  %s8 = int_to_ptr.vmem [resolvable:$true] %s7
  %10 = dma.vmem_to_smem %s8, 16, [#allocation3], [#allocation2]
  %11 = dma.done [#allocation2], 16
  %12 = sfence
  $region1: #{tpu_custom_call.1} parent=0
    #allocation4 [shape = 'u8[1024]{0}', space=vmem, size = 0x400, scoped, tag = 'output window, operand 0']
    #allocation5 [shape = 's32[2]{0}', space=sflag, size = 0x8, scoped, tag = 'scoped memory for tpu_custom_call.1']
    %13 = vsyncpa [#allocation5], 0
    %s14 = scalar_lea.sflag [#allocation5], 1
    %15 = vsyncpa %s14, 0
    loop: start=0, step=1, limit=18
    $region2: #{tpu_custom_call.1} parent=1 // loop_pre_header
      _
    $region3: #{tpu_custom_call.1} parent=1 // loop_header
      %s17 = sphi 0, %s21
      %p18 = scmp.ge.s32.totalorder %s17, 18
      %s29 = sphi 0, %s31
      %s32 = sphi 0, %s29
      %s33 = sphi 0, %s32
      %s49 = sphi 0, %s33
      %s55 = sphi 0, %s57
      %s58 = sphi 0, %s55
      %s59 = sphi 0, %s58
      %s75 = sphi 0, %s59
    $region4: #{tpu_custom_call.1} parent=1 // loop_header_branch
      %20 = sbr.rel (%p18) target = $region8
    $region5: #{tpu_custom_call.1} parent=1 // loop_body
      %s22 = ssub.s32 %s17, 1
      %s23 = ssub.s32 %s17, 2
      %s24 = sadd.s32 %s17, 1
      %s25 = sld [smem:[#allocation3 + %s17]]
      %s26 = sld [smem:[#allocation3 + %s24]]
      %s27 = ssub.s32 %s25, %s26
      %p28 = scmp.eq.s32.totalorder %s27, 0
      %s30 = sadd.s32 %s29, 1
      %s31 = scalar_select %p28, %s29, %s30
      %p34 = pneg %p28
      %p35 = scmp.eq.s32.totalorder %s17, 15
      %p36 = por %p34, %p35
      %p37 = scmp.ne.s32.totalorder %s29, %s32
      %p38 = scmp.eq.s32.totalorder %s17, 0
      %p39 = por %p37, %p38
      %p40 = scmp.ne.s32.totalorder %s29, %s32
      %p41 = scmp.eq.s32.totalorder %s22, 15
      %p42 = por %p40, %p41
      %p43 = scmp.ne.s32.totalorder %s32, %s33
      %p44 = scmp.eq.s32.totalorder %s22, 0
      %p45 = por %p43, %p44
      %p46 = scmp.ne.s32.totalorder %s32, %s33
      %p47 = scmp.eq.s32.totalorder %s23, 15
      %p48 = por %p46, %p47
      %p50 = scmp.ne.s32.totalorder %s33, %s49
      %p51 = scmp.eq.s32.totalorder %s23, 0
      %p52 = por %p50, %p51
      %s53 = ssub.s32 %s17, %s24
      %p54 = scmp.eq.s32.totalorder %s53, 0
      %s56 = sadd.s32 %s55, 1
      %s57 = scalar_select %p54, %s55, %s56
      %p60 = pneg %p54
      %p61 = scmp.eq.s32.totalorder %s17, 15
      %p62 = por %p60, %p61
      %p63 = scmp.ne.s32.totalorder %s55, %s58
      %p64 = scmp.eq.s32.totalorder %s17, 0
      %p65 = por %p63, %p64
      %p66 = scmp.ne.s32.totalorder %s55, %s58
      %p67 = scmp.eq.s32.totalorder %s22, 15
      %p68 = por %p66, %p67
      %p69 = scmp.ne.s32.totalorder %s58, %s59
      %p70 = scmp.eq.s32.totalorder %s22, 0
      %p71 = por %p69, %p70
      %p72 = scmp.ne.s32.totalorder %s58, %s59
      %p73 = scmp.eq.s32.totalorder %s23, 15
      %p74 = por %p72, %p73
      %p76 = scmp.ne.s32.totalorder %s59, %s75
      %p77 = scmp.eq.s32.totalorder %s23, 0
      %p78 = por %p76, %p77
      %p79 = scmp.le.s32.totalorder 1, %s17
      %p80 = scmp.lt.s32.totalorder %s17, 17
      %p81 = pnand %p79, %p80
      %p82 = pneg %p81
      // Predicated region
      $region9: #{tpu_custom_call.1} parent=5 // pred_check
        _
      $region10: #{tpu_custom_call.1} parent=5 // pred_check_branch
        %84 = sbr.rel (%p81) target = $region12
      $region11: #{tpu_custom_call.1} parent=5 // pred_region
        %s85 = ssub.s32 %s17, 1
      $region12: #{tpu_custom_call.1} parent=5 // pred_fallthru
        _
      %p86 = scmp.lt.s32.totalorder %s17, 16
      // Predicated region
      $region13: #{tpu_custom_call.1} parent=5 // pred_check
        %p87 = pneg %p86
      $region14: #{tpu_custom_call.1} parent=5 // pred_check_branch
        %89 = sbr.rel (%p87) target = $region16
      $region15: #{tpu_custom_call.1} parent=5 // pred_region
        // Predicated region
        $region17: #{tpu_custom_call.1} parent=15 // pred_check
          %p90 = pneg %p39
        $region18: #{tpu_custom_call.1} parent=15 // pred_check_branch
          %92 = sbr.rel (%p90) target = $region20
        $region19: #{tpu_custom_call.1} parent=15 // pred_region
          %s93 = sld [smem:[#allocation3 + %s17]]
          %p94 = scmp.lt.s32.totalorder %s93, 31
          %s95 = scalar_select %p94, %s93, 31
          %s96 = scalar_lea.vmem %s1, %s95
          %s97 = sld [smem:[#allocation3 + %s17]]
        $region20: #{tpu_custom_call.1} parent=15 // pred_fallthru
          _
      $region16: #{tpu_custom_call.1} parent=5 // pred_fallthru
        _
      %p98 = scmp.le.s32.totalorder 1, %s17
      %p99 = scmp.lt.s32.totalorder %s17, 17
      %p100 = pnand %p98, %p99
      %p101 = pneg %p100
      // Predicated region
      $region21: #{tpu_custom_call.1} parent=5 // pred_check
        _
      $region22: #{tpu_custom_call.1} parent=5 // pred_check_branch
        %103 = sbr.rel (%p100) target = $region24
      $region23: #{tpu_custom_call.1} parent=5 // pred_region
        %s104 = ssub.s32 %s17, 1
        %s105 = sld [smem:[#allocation3 + %s22]]
        %p106 = scmp.lt.s32.totalorder %s105, 31
        %s107 = scalar_select %p106, %s105, 31
        %s108 = scalar_lea.vmem %s1, %s107
        %p109 = pneg %p45
        %p110 = pneg %p42
        %p111 = pneg %p71
        %p112 = pneg %p68
        %s113 = sand.u32 %s58, 1
        %s114 = scalar_lea.sflag [#allocation5], %s113
        %s115 = sand.u32 %s58, 1
        %s116 = scalar_lea.vmem [#allocation4], %s115
        %s117 = sld [smem:[#allocation3 + %s22]]
        %p118 = scmp.lt.s32.totalorder %s117, 31
        %s119 = scalar_select %p118, %s117, 31
        %s120 = scalar_lea.vmem %s1, %s119
        %s121 = sld [smem:[#allocation3 + %s22]]
        %v122 = vld [vmem:[%s120] sm:$0x1]
        %vm123 = vcmask 122880
        %124 = vst.msk [vmem:[%s116] sm:$0x1] %vm123, %v122
        %s125 = sand.u32 %s58, 1
        %s126 = scalar_lea.sflag [#allocation5], %s125
        %s127 = sand.u32 %s58, 1
        %s128 = scalar_lea.vmem [#allocation4], %s127
        // Predicated region
        $region25: #{tpu_custom_call.1} parent=23 // pred_check
          %p129 = pneg %p68
        $region26: #{tpu_custom_call.1} parent=23 // pred_check_branch
          %131 = sbr.rel (%p129) target = $region28
        $region27: #{tpu_custom_call.1} parent=23 // pred_region
          %s133 = ssub.s32 16, 16
          %134 = vsyncadd %s126, %s133
          %s135 = smul.addr %s22, 16
          %s136 = scalar_lea.hbm %s2, %s135
          %s138 = sshll.u32 %s128, 4
          %s139 = int_to_ptr.vmem [resolvable:$true] %s138
          %141 = dma.vmem_to_hbm [thread:$0]  %s139, 16, %s136, %s126
        $region28: #{tpu_custom_call.1} parent=23 // pred_fallthru
          _
      $region24: #{tpu_custom_call.1} parent=5 // pred_fallthru
        _
      %p142 = scmp.le.s32.totalorder 2, %s17
      // Predicated region
      $region29: #{tpu_custom_call.1} parent=5 // pred_check
        %p143 = pneg %p142
      $region30: #{tpu_custom_call.1} parent=5 // pred_check_branch
        %145 = sbr.rel (%p143) target = $region32
      $region31: #{tpu_custom_call.1} parent=5 // pred_region
        %s146 = ssub.s32 %s17, 2
        // Predicated region
        $region33: #{tpu_custom_call.1} parent=31 // pred_check
          %p147 = pneg %p74
        $region34: #{tpu_custom_call.1} parent=31 // pred_check_branch
          %149 = sbr.rel (%p147) target = $region36
        $region35: #{tpu_custom_call.1} parent=31 // pred_region
          %s150 = sand.u32 %s59, 1
          %s151 = scalar_lea.sflag [#allocation5], %s150
          %s152 = sand.u32 %s59, 1
          %s153 = scalar_lea.vmem [#allocation4], %s152
          %154 = dma.done %s151, 16
        $region36: #{tpu_custom_call.1} parent=31 // pred_fallthru
          _
      $region32: #{tpu_custom_call.1} parent=5 // pred_fallthru
        _
    $region6: #{tpu_custom_call.1} parent=1 // loop_footer
      %s21 = sadd.s32 1, %s17
    $region7: #{tpu_custom_call.1} parent=1 // loop_footer_branch
      %16 = sbr.rel target = $region3
    $region8: #{tpu_custom_call.1} parent=1 // loop_exit
      _
    %155 = vsyncpa [#allocation5], 1
    %s156 = scalar_lea.sflag [#allocation5], 1
    %157 = vsyncpa %s156, 1

</llo_original>
